<compile_context>
chip_gen: v7x
topology: tpu7x:2x2x1
jax: 0.10.0
libtpu: 0.0.40
codegen_flags: <defaults>
</compile_context>

<pallas_src>
import math
import numpy as np
import jax
import jax.numpy as jnp
from jax import lax
from jax.experimental import pallas as pl
from jax.experimental.pallas import tpu as pltpu

INVSQRT2 = 0.7071067811865476
BN_EPS = 1e-5
GT_SENTINEL = 1.0e4        # 0.5 + 0.5*erf(x + 1e4)  == 1.0 exactly in f32
PAD_SHIFT = -1.0e20        # 0.5 + 0.5*erf(-1e20 + x) == 0.0 exactly in f32

_TARGET_ELEMS_PER_STEP = 1 << 20   # aim for ~1M erf evals per grid step
_CLASS_BLOCK = 1024                # classes per step when tiling the class axis
_FULL_UNROLL_MAX = 16              # fully unroll the class loop up to this C-1
_FORI_UNROLL = 8                   # fori_loop unroll factor for larger C


# ----------------------------------------------------------------------------
# Host-side helpers
# ----------------------------------------------------------------------------
def _np_erfinv(y):
    """Host-side (numpy) erfinv: Winitzki initial guess + Newton with math.erf."""
    y = np.asarray(y, dtype=np.float64)
    a = 0.147
    ln1my2 = np.log1p(-y * y)
    t1 = 2.0 / (np.pi * a) + 0.5 * ln1my2
    x = np.sign(y) * np.sqrt(np.sqrt(t1 * t1 - ln1my2 / a) - t1)
    erf_v = np.vectorize(math.erf)
    for _ in range(3):
        x = x - (erf_v(x) - y) * (math.sqrt(math.pi) / 2.0) * np.exp(x * x)
    return x


def _erf_poly(x):
    """Single-branch erf (Abramowitz & Stegun 7.1.26, |err| < 1.5e-7).

    One EUP exp + one approx EUP reciprocal (refined with a Newton step) + a
    5-term Horner polynomial.  Fewer VALU ops/element than the branchy lax.erf
    expansion, so it is the default on the VALU-bound path.  Sentinel handling
    stays in f32: erf(+1e4) == 1.0 and erf(-1e20 + small) == -1.0 exactly.
    """
    a1, a2, a3, a4, a5 = 0.254829592, -0.284496736, 1.421413741, -1.453152027, 1.061405429
    p = 0.3275911
    s = jnp.sign(x)
    ax = jnp.abs(x)
    den = 1.0 + p * ax
    t = pl.reciprocal(den, approx=True)      # EUP push (free slot)
    t = t * (2.0 - den * t)                  # one Newton step -> ~f32-exact 1/den
    poly = ((((a5 * t + a4) * t + a3) * t + a2) * t + a1) * t
    return s * (1.0 - poly * jnp.exp(-ax * ax))


# ----------------------------------------------------------------------------
# Kernel
# ----------------------------------------------------------------------------
def _make_loss_kernel(tc, nct, sample_size, erf_fn, lane_dense_out):
    """Build the per-batch-tile loss kernel.

    tc   : classes handled per grid step (static).
    nct  : number of class tiles (1 -> no class grid axis / no scratch).
    """
    neg_inv_s = -1.0 / float(sample_size)

    def factor(shifts, col):
        # Standard-normal CDF at (shift + scaled delta); shifts (1,S), col (bt,1).
        return 0.5 + 0.5 * erf_fn(shifts + col)

    def write_out(out_ref, prod):
        # Padded lanes carry a product of exactly 0, so sum/sample_size is the
        # mean over the real S samples.
        row = jnp.sum(prod, axis=-1) * neg_inv_s            # (bt,)
        if lane_dense_out:
            out_ref[...] = row.reshape(1, prod.shape[0])    # lane-dense (1, bt)
        else:
            out_ref[...] = row.reshape(prod.shape[0], 1)    # column (bt, 1)

    if nct == 1:
        def kernel(deltas_ref, shifts_ref, out_ref):
            shifts = shifts_ref[...]                                 # (1, s_pad)
            prod = factor(shifts, deltas_ref[:, 0:1])                # seed: class 0
            if tc <= _FULL_UNROLL_MAX:
                for c in range(1, tc):
                    prod = prod * factor(shifts, deltas_ref[:, c:c + 1])
            else:
                def body(c, p):
                    return p * factor(shifts, deltas_ref[:, pl.ds(c, 1)])
                prod = lax.fori_loop(1, tc, body, prod, unroll=_FORI_UNROLL)
            write_out(out_ref, prod)

        return kernel, False

    def kernel(deltas_ref, shifts_ref, out_ref, prod_ref):
        ci = pl.program_id(1)
        shifts = shifts_ref[...]                                     # (1, s_pad)

        @pl.when(ci == 0)
        def _():
            prod_ref[...] = jnp.ones_like(prod_ref)

        def body(c, p):
            return p * factor(shifts, deltas_ref[:, pl.ds(c, 1)])

        prod = lax.fori_loop(0, tc, body, prod_ref[...], unroll=_FORI_UNROLL)
        prod_ref[...] = prod

        @pl.when(ci == nct - 1)
        def _():
            write_out(out_ref, prod)

    return kernel, True


# ----------------------------------------------------------------------------
# Tiling heuristics
# ----------------------------------------------------------------------------
def _pick_batch_grid(B, work_per_row, batch_tile):
    """Choose (bt, nb, b_pad): bt % 8 == 0, ~1M erf evals per step, an even
    step count whenever the batch allows (two v7x TensorCores), small padding."""
    def up8(x):
        return max(8, ((int(x) + 7) // 8) * 8)

    if batch_tile is None:
        bt = (_TARGET_ELEMS_PER_STEP + work_per_row - 1) // max(1, work_per_row)
        bt = min(1024, bt)
    else:
        bt = int(batch_tile)
    bt = up8(bt)
    bt = min(bt, up8(B))                      # never bigger than the padded batch
    if B >= 16:                               # keep >= 2 grid steps
        bt = min(bt, up8((B + 1) // 2))

    nb = -(-B // bt)
    if nb > 1 and nb % 2:                     # prefer an even step count (v7x)
        bt_try = up8(-(-B // (nb + 1)))
        if (-(-B // bt_try)) % 2 == 0:
            bt = bt_try
            nb = -(-B // bt)
    # shrink bt to just cover B with the chosen step count (less padded work)
    bt_fit = up8(-(-B // nb))
    if -(-B // bt_fit) == nb:
        bt = bt_fit
    return bt, nb, nb * bt


def _vmem_limit_bytes(bt, tc, s_pad, nct):
    need = (2 * bt * tc * 4                    # deltas block, double-buffered
            + 2 * s_pad * 4                    # shifts block
            + 2 * bt * 4                       # output block
            + (bt * s_pad * 4 if nct > 1 else 0)   # product accumulator scratch
            + 4 * bt * s_pad * 4)              # in-flight temporaries (prod/z/cdf)
    if need <= 12 * 2**20:                     # comfortably inside default scoped VMEM
        return None
    return int(min(48 * 2**20, 2 * need))      # headroom; <= v7x 64 MiB physical


def _reduce(per_sample, reduction):
    if reduction == 'mean':
        return per_sample.mean()
    if reduction == 'sum':
        return per_sample.sum()
    return per_sample


# ----------------------------------------------------------------------------
# Public entry point
# ----------------------------------------------------------------------------
def exaqoot_loss(logits, labels, *, sample_size=256, batch_norm=True, sigma=1.0,
                 margin=None, reduction='mean', batch_tile=None, erf_fn=None,
                 lane_dense_out=True):
    """Pallas implementation of EXAQOOT.forward for 2-D logits (B, C)."""
    logits = jnp.asarray(logits, jnp.float32)
    labels = jnp.asarray(labels, jnp.int32)
    B, C = logits.shape

    # --- glue: F.batch_norm(logits, None, None, training=True) --------------
    if batch_norm:
        mean = jnp.mean(logits, axis=0, keepdims=True)
        var = jnp.mean((logits - mean) ** 2, axis=0, keepdims=True)  # biased var
        logits = (logits - mean) / jnp.sqrt(var + BN_EPS)

    # --- glue: deltas = gt_logit - logit_c, clipped, pre-scaled --------------
    gt = jnp.take_along_axis(logits, labels[:, None], axis=1)         # (B, 1)
    deltas = gt - logits                                              # (B, C)
    if margin is not None:
        deltas = jnp.minimum(deltas, margin)                          # clip(max=margin)
    deltas = deltas * (INVSQRT2 / float(sigma))

    if C == 1:
        # Empty product over non-gt classes == 1 -> loss is -1 per sample.
        return _reduce(jnp.full((B,), -1.0, jnp.float32), reduction)

    # --- drop the gt column (its CDF factor is exactly 1): saves 1/C of erf --
    Cm1 = C - 1
    col = jnp.arange(Cm1, dtype=jnp.int32)[None, :]                   # (1, C-1)
    col = col + (col >= labels[:, None]).astype(jnp.int32)            # skip gt index
    deltas = jnp.take_along_axis(deltas, col, axis=1)                 # (B, C-1)

    # --- host-side shifts table on the lane axis, padded with PAD_SHIFT ------
    shifts_np = _np_erfinv(
        np.linspace(-1.0, 1.0, sample_size + 2)[1:-1]).astype(np.float32)
    s_pad = max(128, ((sample_size + 127) // 128) * 128)
    shifts_full = np.full((1, s_pad), PAD_SHIFT, dtype=np.float32)
    shifts_full[0, :sample_size] = shifts_np
    shifts = jnp.asarray(shifts_full)

    # --- class tiling (only when C is large; padded classes -> factor 1) -----
    if Cm1 <= _CLASS_BLOCK:
        tc, nct, c_pad = Cm1, 1, Cm1
    else:
        tc = _CLASS_BLOCK
        nct = -(-Cm1 // tc)
        c_pad = nct * tc
        deltas = jnp.pad(deltas, ((0, 0), (0, c_pad - Cm1)),
                         constant_values=GT_SENTINEL)

    # --- batch tiling ---------------------------------------------------------
    bt, nb, b_pad = _pick_batch_grid(B, tc * s_pad, batch_tile)
    if b_pad != B:
        deltas = jnp.pad(deltas, ((0, b_pad - B), (0, 0)))   # garbage rows, sliced off

    kernel, needs_scratch = _make_loss_kernel(
        tc, nct, sample_size, erf_fn if erf_fn is not None else _erf_poly,
        lane_dense_out)

    if nct == 1:
        grid = (nb,)
        in_specs = [pl.BlockSpec((bt, tc), lambda i: (i, 0)),
                    pl.BlockSpec((1, s_pad), lambda i: (0, 0))]
        out_spec = (pl.BlockSpec((1, bt), lambda i: (i, 0)) if lane_dense_out
                    else pl.BlockSpec((bt, 1), lambda i: (i, 0)))
        dims = ("parallel",)
    else:
        grid = (nb, nct)                                      # reduction axis last
        in_specs = [pl.BlockSpec((bt, tc), lambda i, c: (i, c)),
                    pl.BlockSpec((1, s_pad), lambda i, c: (0, 0))]
        out_spec = (pl.BlockSpec((1, bt), lambda i, c: (i, 0)) if lane_dense_out
                    else pl.BlockSpec((bt, 1), lambda i, c: (i, 0)))
        dims = ("parallel", "arbitrary")
    scratch = [pltpu.VMEM((bt, s_pad), jnp.float32)] if needs_scratch else []

    out_shape = (jax.ShapeDtypeStruct((nb, bt), jnp.float32) if lane_dense_out
                 else jax.ShapeDtypeStruct((b_pad, 1), jnp.float32))

    elems = b_pad * c_pad * s_pad
    cost = pl.CostEstimate(flops=14 * elems, transcendentals=2 * elems,
                           bytes_accessed=b_pad * c_pad * 4 + s_pad * 4 + b_pad * 4)

    out = pl.pallas_call(
        kernel,
        out_shape=out_shape,
        grid=grid,
        in_specs=in_specs,
        out_specs=out_spec,
        scratch_shapes=scratch,
        compiler_params=pltpu.CompilerParams(
            dimension_semantics=dims,
            vmem_limit_bytes=_vmem_limit_bytes(bt, tc, s_pad, nct)),
        cost_estimate=cost,
    )(deltas, shifts)

    per_sample = out.reshape(-1)[:B] if lane_dense_out else out[:B, 0]
    return _reduce(per_sample, reduction)


# ----------------------------------------------------------------------------
# Pure-JAX reference mirroring the PyTorch forward
# ----------------------------------------------------------------------------
def exaqoot_ref(logits, labels, *, sample_size=256, batch_norm=True, sigma=1.0,
                margin=None, reduction='mean'):
    logits = jnp.asarray(logits, jnp.float32)
    B, C = logits.shape
    if batch_norm:
        mean = jnp.mean(logits, axis=0, keepdims=True)
        var = jnp.mean((logits - mean) ** 2, axis=0, keepdims=True)
        logits = (logits - mean) / jnp.sqrt(var + BN_EPS)
    shifts = jnp.asarray(_np_erfinv(
        np.linspace(-1.0, 1.0, sample_size + 2)[1:-1]).astype(np.float32))
    gt = jnp.take_along_axis(logits, labels[:, None], axis=1)
    deltas = gt - logits                                              # (B, C)
    if margin is not None:
        deltas = jnp.minimum(deltas, margin)
    cdf = 0.5 + 0.5 * jax.scipy.special.erf(
        shifts[None, None, :] + deltas[:, :, None] / sigma * INVSQRT2)  # (B,C,S)
    is_gt = labels[:, None] == jnp.arange(C)[None, :]
    factors = jnp.where(is_gt[:, :, None], 1.0, cdf)   # gt class excluded (factor 1)
    per_sample = -jnp.mean(jnp.prod(factors, axis=1), axis=-1)        # (B,)
    return _reduce(per_sample, reduction)


if __name__ == "__main__":
    key = jax.random.PRNGKey(0)
    k1, k2 = jax.random.split(key)
    B, C, S = 16, 10, 128                       # small shapes; sample_size=S
    logits = jax.random.normal(k1, (B, C), dtype=jnp.float32)
    labels = jax.random.randint(k2, (B,), 0, C, dtype=jnp.int32)

    # Preferred config first (poly erf + lane-dense out); fall back to Mosaic's
    # lax.erf and finally to the column-output layout only if lowering rejects.
    attempts = (
        dict(),
        dict(erf_fn=lax.erf),
        dict(erf_fn=lax.erf, lane_dense_out=False),
    )
    loss, last_err = None, None
    for cfg in attempts:
        try:
            loss = jax.block_until_ready(
                exaqoot_loss(logits, labels, sample_size=S, **cfg))
            break
        except Exception as err:                # lowering fallback only
            last_err = err
    if loss is None:
        raise last_err

    ref = jax.block_until_ready(exaqoot_ref(logits, labels, sample_size=S))
    assert np.allclose(np.asarray(loss), np.asarray(ref), atol=1e-4, rtol=1e-4), \
        (float(loss), float(ref))
    print("KERNEL_OK")
</pallas_src>

<mosaic_0001>
module attributes {stable_mosaic.version = 11 : i64} {
  func.func @kernel(%arg0: i32, %arg1: memref<8x9xf32, #tpu.memory_space<vmem>>, %arg2: memref<1x128xf32, #tpu.memory_space<vmem>>, %arg3: memref<8x1xf32, #tpu.memory_space<vmem>>) attributes {dimension_semantics = [#tpu.dimension_semantics<parallel>], iteration_bounds = array<i64: 2>, scalar_prefetch = 0 : i64, scratch_operands = 0 : i64, tpu.core_type = #tpu.core_type<tc>, window_params = [{transform_indices = @transform_0, window_bounds = array<i64: 8, 9>}, {pipeline_mode = #tpu.pipeline_mode<synchronous>, transform_indices = @transform_1, window_bounds = array<i64: 1, 128>}, {transform_indices = @transform_2, window_bounds = array<i64: 8, 1>}]} {
    %c0 = arith.constant 0 : index
    %c0_0 = arith.constant 0 : index
    %0 = vector.load %arg2[%c0, %c0_0] : memref<1x128xf32, #tpu.memory_space<vmem>>, vector<1x128xf32>
    %c0_1 = arith.constant 0 : index
    %c0_2 = arith.constant 0 : index
    %1 = vector.load %arg1[%c0_1, %c0_2] : memref<8x9xf32, #tpu.memory_space<vmem>>, vector<8x1xf32>
    %2 = vector.broadcast %0 : vector<1x128xf32> to vector<8x128xf32>
    %3 = vector.broadcast %1 : vector<8x1xf32> to vector<8x128xf32>
    %4 = arith.addf %2, %3 : vector<8x128xf32>
    %5 = math.erf %4 : vector<8x128xf32>
    %cst = arith.constant 5.000000e-01 : f32
    %6 = vector.broadcast %cst : f32 to vector<8x128xf32>
    %7 = arith.mulf %6, %5 : vector<8x128xf32>
    %cst_3 = arith.constant 5.000000e-01 : f32
    %8 = vector.broadcast %cst_3 : f32 to vector<8x128xf32>
    %9 = arith.addf %8, %7 : vector<8x128xf32>
    %c0_4 = arith.constant 0 : index
    %c1 = arith.constant 1 : index
    %10 = vector.load %arg1[%c0_4, %c1] : memref<8x9xf32, #tpu.memory_space<vmem>>, vector<8x1xf32>
    %11 = vector.broadcast %0 : vector<1x128xf32> to vector<8x128xf32>
    %12 = vector.broadcast %10 : vector<8x1xf32> to vector<8x128xf32>
    %13 = arith.addf %11, %12 : vector<8x128xf32>
    %14 = math.erf %13 : vector<8x128xf32>
    %cst_5 = arith.constant 5.000000e-01 : f32
    %15 = vector.broadcast %cst_5 : f32 to vector<8x128xf32>
    %16 = arith.mulf %15, %14 : vector<8x128xf32>
    %cst_6 = arith.constant 5.000000e-01 : f32
    %17 = vector.broadcast %cst_6 : f32 to vector<8x128xf32>
    %18 = arith.addf %17, %16 : vector<8x128xf32>
    %19 = arith.mulf %9, %18 : vector<8x128xf32>
    %c0_7 = arith.constant 0 : index
    %c2 = arith.constant 2 : index
    %20 = vector.load %arg1[%c0_7, %c2] : memref<8x9xf32, #tpu.memory_space<vmem>>, vector<8x1xf32>
    %21 = vector.broadcast %0 : vector<1x128xf32> to vector<8x128xf32>
    %22 = vector.broadcast %20 : vector<8x1xf32> to vector<8x128xf32>
    %23 = arith.addf %21, %22 : vector<8x128xf32>
    %24 = math.erf %23 : vector<8x128xf32>
    %cst_8 = arith.constant 5.000000e-01 : f32
    %25 = vector.broadcast %cst_8 : f32 to vector<8x128xf32>
    %26 = arith.mulf %25, %24 : vector<8x128xf32>
    %cst_9 = arith.constant 5.000000e-01 : f32
    %27 = vector.broadcast %cst_9 : f32 to vector<8x128xf32>
    %28 = arith.addf %27, %26 : vector<8x128xf32>
    %29 = arith.mulf %19, %28 : vector<8x128xf32>
    %c0_10 = arith.constant 0 : index
    %c3 = arith.constant 3 : index
    %30 = vector.load %arg1[%c0_10, %c3] : memref<8x9xf32, #tpu.memory_space<vmem>>, vector<8x1xf32>
    %31 = vector.broadcast %0 : vector<1x128xf32> to vector<8x128xf32>
    %32 = vector.broadcast %30 : vector<8x1xf32> to vector<8x128xf32>
    %33 = arith.addf %31, %32 : vector<8x128xf32>
    %34 = math.erf %33 : vector<8x128xf32>
    %cst_11 = arith.constant 5.000000e-01 : f32
    %35 = vector.broadcast %cst_11 : f32 to vector<8x128xf32>
    %36 = arith.mulf %35, %34 : vector<8x128xf32>
    %cst_12 = arith.constant 5.000000e-01 : f32
    %37 = vector.broadcast %cst_12 : f32 to vector<8x128xf32>
    %38 = arith.addf %37, %36 : vector<8x128xf32>
    %39 = arith.mulf %29, %38 : vector<8x128xf32>
    %c0_13 = arith.constant 0 : index
    %c4 = arith.constant 4 : index
    %40 = vector.load %arg1[%c0_13, %c4] : memref<8x9xf32, #tpu.memory_space<vmem>>, vector<8x1xf32>
    %41 = vector.broadcast %0 : vector<1x128xf32> to vector<8x128xf32>
    %42 = vector.broadcast %40 : vector<8x1xf32> to vector<8x128xf32>
    %43 = arith.addf %41, %42 : vector<8x128xf32>
    %44 = math.erf %43 : vector<8x128xf32>
    %cst_14 = arith.constant 5.000000e-01 : f32
    %45 = vector.broadcast %cst_14 : f32 to vector<8x128xf32>
    %46 = arith.mulf %45, %44 : vector<8x128xf32>
    %cst_15 = arith.constant 5.000000e-01 : f32
    %47 = vector.broadcast %cst_15 : f32 to vector<8x128xf32>
    %48 = arith.addf %47, %46 : vector<8x128xf32>
    %49 = arith.mulf %39, %48 : vector<8x128xf32>
    %c0_16 = arith.constant 0 : index
    %c5 = arith.constant 5 : index
    %50 = vector.load %arg1[%c0_16, %c5] : memref<8x9xf32, #tpu.memory_space<vmem>>, vector<8x1xf32>
    %51 = vector.broadcast %0 : vector<1x128xf32> to vector<8x128xf32>
    %52 = vector.broadcast %50 : vector<8x1xf32> to vector<8x128xf32>
    %53 = arith.addf %51, %52 : vector<8x128xf32>
    %54 = math.erf %53 : vector<8x128xf32>
    %cst_17 = arith.constant 5.000000e-01 : f32
    %55 = vector.broadcast %cst_17 : f32 to vector<8x128xf32>
    %56 = arith.mulf %55, %54 : vector<8x128xf32>
    %cst_18 = arith.constant 5.000000e-01 : f32
    %57 = vector.broadcast %cst_18 : f32 to vector<8x128xf32>
    %58 = arith.addf %57, %56 : vector<8x128xf32>
    %59 = arith.mulf %49, %58 : vector<8x128xf32>
    %c0_19 = arith.constant 0 : index
    %c6 = arith.constant 6 : index
    %60 = vector.load %arg1[%c0_19, %c6] : memref<8x9xf32, #tpu.memory_space<vmem>>, vector<8x1xf32>
    %61 = vector.broadcast %0 : vector<1x128xf32> to vector<8x128xf32>
    %62 = vector.broadcast %60 : vector<8x1xf32> to vector<8x128xf32>
    %63 = arith.addf %61, %62 : vector<8x128xf32>
    %64 = math.erf %63 : vector<8x128xf32>
    %cst_20 = arith.constant 5.000000e-01 : f32
    %65 = vector.broadcast %cst_20 : f32 to vector<8x128xf32>
    %66 = arith.mulf %65, %64 : vector<8x128xf32>
    %cst_21 = arith.constant 5.000000e-01 : f32
    %67 = vector.broadcast %cst_21 : f32 to vector<8x128xf32>
    %68 = arith.addf %67, %66 : vector<8x128xf32>
    %69 = arith.mulf %59, %68 : vector<8x128xf32>
    %c0_22 = arith.constant 0 : index
    %c7 = arith.constant 7 : index
    %70 = vector.load %arg1[%c0_22, %c7] : memref<8x9xf32, #tpu.memory_space<vmem>>, vector<8x1xf32>
    %71 = vector.broadcast %0 : vector<1x128xf32> to vector<8x128xf32>
    %72 = vector.broadcast %70 : vector<8x1xf32> to vector<8x128xf32>
    %73 = arith.addf %71, %72 : vector<8x128xf32>
    %74 = math.erf %73 : vector<8x128xf32>
    %cst_23 = arith.constant 5.000000e-01 : f32
    %75 = vector.broadcast %cst_23 : f32 to vector<8x128xf32>
    %76 = arith.mulf %75, %74 : vector<8x128xf32>
    %cst_24 = arith.constant 5.000000e-01 : f32
    %77 = vector.broadcast %cst_24 : f32 to vector<8x128xf32>
    %78 = arith.addf %77, %76 : vector<8x128xf32>
    %79 = arith.mulf %69, %78 : vector<8x128xf32>
    %c0_25 = arith.constant 0 : index
    %c8 = arith.constant 8 : index
    %80 = vector.load %arg1[%c0_25, %c8] : memref<8x9xf32, #tpu.memory_space<vmem>>, vector<8x1xf32>
    %81 = vector.broadcast %0 : vector<1x128xf32> to vector<8x128xf32>
    %82 = vector.broadcast %80 : vector<8x1xf32> to vector<8x128xf32>
    %83 = arith.addf %81, %82 : vector<8x128xf32>
    %84 = math.erf %83 : vector<8x128xf32>
    %cst_26 = arith.constant 5.000000e-01 : f32
    %85 = vector.broadcast %cst_26 : f32 to vector<8x128xf32>
    %86 = arith.mulf %85, %84 : vector<8x128xf32>
    %cst_27 = arith.constant 5.000000e-01 : f32
    %87 = vector.broadcast %cst_27 : f32 to vector<8x128xf32>
    %88 = arith.addf %87, %86 : vector<8x128xf32>
    %89 = arith.mulf %79, %88 : vector<8x128xf32>
    %cst_28 = arith.constant dense<0.000000e+00> : vector<8xf32>
    %90 = vector.multi_reduction <add>, %89, %cst_28 [1] : vector<8x128xf32> to vector<8xf32>
    %cst_29 = arith.constant -7.812500e-03 : f32
    %91 = vector.broadcast %cst_29 : f32 to vector<8xf32>
    %92 = arith.mulf %90, %91 : vector<8xf32>
    %93 = vector.shape_cast %92 : vector<8xf32> to vector<8x1xf32>
    %c0_30 = arith.constant 0 : index
    %c0_31 = arith.constant 0 : index
    %94 = vector.load %arg3[%c0_30, %c0_31] : memref<8x1xf32, #tpu.memory_space<vmem>>, vector<8x1xf32>
    tpu.vector_store %arg3[%c0_30, %c0_31], %93 {strides = array<i32>} : memref<8x1xf32, #tpu.memory_space<vmem>>, vector<8x1xf32>,
    return
  }
  func.func @transform_0(%arg0: i32) -> (i32, i32) {
    %c0_i32 = arith.constant 0 : i32
    %c0_i32_0 = arith.constant 0 : i32
    return %arg0, %c0_i32 : i32, i32
  }
  func.func @transform_1(%arg0: i32) -> (i32, i32) {
    %c0_i32 = arith.constant 0 : i32
    %c0_i32_0 = arith.constant 0 : i32
    %c0_i32_1 = arith.constant 0 : i32
    return %c0_i32, %c0_i32_0 : i32, i32
  }
  func.func @transform_2(%arg0: i32) -> (i32, i32) {
    %c0_i32 = arith.constant 0 : i32
    %c0_i32_0 = arith.constant 0 : i32
    return %arg0, %c0_i32 : i32, i32
  }
}

</mosaic_0001>

<llo_original>
// kernel: tpu_custom_call.1
$region0: #{tpu_custom_call.1}
  #allocation0 [shape = 'u32[]', space=smem, size = 0x4, offset = 0x4, fixed_abs, tag = 'smem constant byte address 0x4 - core index']
  #allocation1 [shape = 'u32[144,128]{1,0:T(1,128)}', space=vmem, size = 0x12000, scoped, tag = 'internal scratch']
  %s0 = inlined_call_operand.hbm [shape: f32[16,9], index: 0, kind: input, shape index: {}]
  %s1 = inlined_call_operand.vmem [shape: f32[1,128], index: 1, kind: input, shape index: {}]
  %s2 = inlined_call_operand.vmem [shape: f32[16,1], index: 2, kind: output, shape index: {}]
  %s3 = sld [smem:[#allocation0]]
  $region45: #{tpu_custom_call.1} parent=0
    _
  %s5 = ssub.s32 1, %s3
  %s6 = scalar_select 0, %s5, %s3
  $region1: #{tpu_custom_call.1} parent=0
    #allocation2 [shape = 'u8[8192]{0}', space=vmem, size = 0x2000, scoped, tag = 'input window, operand 0']
    #allocation3 [shape = 's32[2]{0}', space=sflag, size = 0x8, scoped, tag = 'scoped memory for tpu_custom_call.1']
    %7 = vsyncpa [#allocation3], 0
    %s8 = scalar_lea.sflag [#allocation3], 1
    %9 = vsyncpa %s8, 0
    loop: start=0, step=1, limit=4
    $region2: #{tpu_custom_call.1} parent=1 // loop_pre_header
      _
    $region3: #{tpu_custom_call.1} parent=1 // loop_header
      %s11 = sphi 0, %s15
      %p12 = scmp.ge.s32.totalorder %s11, 4
      %s21 = sphi 0, %s23
      %s24 = sphi 0, %s21
      %s25 = sphi 0, %s24
      %s41 = sphi 0, %s25
      %s45 = sphi 0, %s45
      %s47 = sphi 0, %s45
      %s48 = sphi 0, %s47
      %s62 = sphi 0, %s48
      %s68 = sphi 0, %s70
      %s71 = sphi 0, %s68
      %s72 = sphi 0, %s71
      %s88 = sphi 0, %s72
    $region4: #{tpu_custom_call.1} parent=1 // loop_header_branch
      %14 = sbr.rel (%p12) target = $region8
    $region5: #{tpu_custom_call.1} parent=1 // loop_body
      %s16 = ssub.s32 %s11, 1
      %s17 = ssub.s32 %s11, 2
      %s18 = sadd.s32 %s11, 1
      %s19 = ssub.s32 %s11, %s18
      %p20 = scmp.eq.s32.totalorder %s19, 0
      %s22 = sadd.s32 %s21, 1
      %s23 = scalar_select %p20, %s21, %s22
      %p26 = pneg %p20
      %p27 = scmp.eq.s32.totalorder %s11, 1
      %p28 = por %p26, %p27
      %p29 = scmp.ne.s32.totalorder %s21, %s24
      %p30 = scmp.eq.s32.totalorder %s11, 0
      %p31 = por %p29, %p30
      %p32 = scmp.ne.s32.totalorder %s21, %s24
      %p33 = scmp.eq.s32.totalorder %s16, 1
      %p34 = por %p32, %p33
      %p35 = scmp.ne.s32.totalorder %s24, %s25
      %p36 = scmp.eq.s32.totalorder %s16, 0
      %p37 = por %p35, %p36
      %p38 = scmp.ne.s32.totalorder %s24, %s25
      %p39 = scmp.eq.s32.totalorder %s17, 1
      %p40 = por %p38, %p39
      %p42 = scmp.ne.s32.totalorder %s25, %s41
      %p43 = scmp.eq.s32.totalorder %s17, 0
      %p44 = por %p42, %p43
      %s46 = sadd.s32 %s45, 1
      %p49 = scmp.eq.s32.totalorder %s11, 1
      %p50 = scmp.ne.s32.totalorder %s45, %s47
      %p51 = scmp.eq.s32.totalorder %s11, 0
      %p52 = por %p50, %p51
      %p53 = scmp.ne.s32.totalorder %s45, %s47
      %p54 = scmp.eq.s32.totalorder %s16, 1
      %p55 = por %p53, %p54
      %p56 = scmp.ne.s32.totalorder %s47, %s48
      %p57 = scmp.eq.s32.totalorder %s16, 0
      %p58 = por %p56, %p57
      %p59 = scmp.ne.s32.totalorder %s47, %s48
      %p60 = scmp.eq.s32.totalorder %s17, 1
      %p61 = por %p59, %p60
      %p63 = scmp.ne.s32.totalorder %s48, %s62
      %p64 = scmp.eq.s32.totalorder %s17, 0
      %p65 = por %p63, %p64
      %s66 = ssub.s32 %s11, %s18
      %p67 = scmp.eq.s32.totalorder %s66, 0
      %s69 = sadd.s32 %s68, 1
      %s70 = scalar_select %p67, %s68, %s69
      %p73 = pneg %p67
      %p74 = scmp.eq.s32.totalorder %s11, 1
      %p75 = por %p73, %p74
      %p76 = scmp.ne.s32.totalorder %s68, %s71
      %p77 = scmp.eq.s32.totalorder %s11, 0
      %p78 = por %p76, %p77
      %p79 = scmp.ne.s32.totalorder %s68, %s71
      %p80 = scmp.eq.s32.totalorder %s16, 1
      %p81 = por %p79, %p80
      %p82 = scmp.ne.s32.totalorder %s71, %s72
      %p83 = scmp.eq.s32.totalorder %s16, 0
      %p84 = por %p82, %p83
      %p85 = scmp.ne.s32.totalorder %s71, %s72
      %p86 = scmp.eq.s32.totalorder %s17, 1
      %p87 = por %p85, %p86
      %p89 = scmp.ne.s32.totalorder %s72, %s88
      %p90 = scmp.eq.s32.totalorder %s17, 0
      %p91 = por %p89, %p90
      %p92 = scmp.le.s32.totalorder 1, %s11
      %p93 = scmp.lt.s32.totalorder %s11, 3
      %p94 = pnand %p92, %p93
      %p95 = pneg %p94
      // Predicated region
      $region9: #{tpu_custom_call.1} parent=5 // pred_check
        _
      $region10: #{tpu_custom_call.1} parent=5 // pred_check_branch
        %97 = sbr.rel (%p94) target = $region12
      $region11: #{tpu_custom_call.1} parent=5 // pred_region
        %s98 = ssub.s32 %s11, 1
        // Predicated region
        $region13: #{tpu_custom_call.1} parent=11 // pred_check
          %p99 = pneg %p58
        $region14: #{tpu_custom_call.1} parent=11 // pred_check_branch
          %101 = sbr.rel (%p99) target = $region16
        $region15: #{tpu_custom_call.1} parent=11 // pred_region
          _
        $region16: #{tpu_custom_call.1} parent=11 // pred_fallthru
          _
      $region12: #{tpu_custom_call.1} parent=5 // pred_fallthru
        _
      %p102 = scmp.lt.s32.totalorder %s11, 2
      // Predicated region
      $region17: #{tpu_custom_call.1} parent=5 // pred_check
        %p103 = pneg %p102
      $region18: #{tpu_custom_call.1} parent=5 // pred_check_branch
        %105 = sbr.rel (%p103) target = $region20
      $region19: #{tpu_custom_call.1} parent=5 // pred_region
        // Predicated region
        $region21: #{tpu_custom_call.1} parent=19 // pred_check
          %p106 = pneg %p31
        $region22: #{tpu_custom_call.1} parent=19 // pred_check_branch
          %108 = sbr.rel (%p106) target = $region24
        $region23: #{tpu_custom_call.1} parent=19 // pred_region
          %s109 = sand.u32 %s21, 1
          %s110 = scalar_lea.sflag [#allocation3], %s109
          %s111 = sand.u32 %s21, 1
          %s112 = smul.addr %s111, 8
          %s113 = scalar_lea.vmem [#allocation2], %s112
          %s115 = ssub.s32 128, 128
          %116 = vsyncadd %s110, %s115
          %s117 = smul.addr %s11, 128
          %s118 = scalar_lea.hbm %s0, %s117
          %s120 = sshll.u32 %s113, 4
          %s121 = int_to_ptr.vmem [resolvable:$true] %s120
          %123 = dma.hbm_to_vmem [thread:$0]  %s118, 128, %s121, %s110
        $region24: #{tpu_custom_call.1} parent=19 // pred_fallthru
          _
      $region20: #{tpu_custom_call.1} parent=5 // pred_fallthru
        _
      %p124 = scmp.le.s32.totalorder 1, %s11
      %p125 = scmp.lt.s32.totalorder %s11, 3
      %p126 = pnand %p124, %p125
      %p127 = pneg %p126
      // Predicated region
      $region25: #{tpu_custom_call.1} parent=5 // pred_check
        _
      $region26: #{tpu_custom_call.1} parent=5 // pred_check_branch
        %129 = sbr.rel (%p126) target = $region28
      $region27: #{tpu_custom_call.1} parent=5 // pred_region
        %s130 = ssub.s32 %s11, 1
        %s131 = sand.u32 %s24, 1
        %s132 = scalar_lea.sflag [#allocation3], %s131
        %s133 = sand.u32 %s24, 1
        %s134 = smul.addr %s133, 8
        %s135 = scalar_lea.vmem [#allocation2], %s134
        // Predicated region
        $region29: #{tpu_custom_call.1} parent=27 // pred_check
          %p136 = pneg %p37
        $region30: #{tpu_custom_call.1} parent=27 // pred_check_branch
          %138 = sbr.rel (%p136) target = $region32
        $region31: #{tpu_custom_call.1} parent=27 // pred_region
          %139 = dma.done %s132, 128
        $region32: #{tpu_custom_call.1} parent=27 // pred_fallthru
          _
        %s140 = sand.u32 %s24, 1
        %s141 = scalar_lea.sflag [#allocation3], %s140
        %s142 = sand.u32 %s24, 1
        %s143 = smul.addr %s142, 8
        %s144 = scalar_lea.vmem [#allocation2], %s143
        %p145 = pneg %p37
        %p146 = pneg %p34
        %p147 = pneg %p58
        %p148 = pneg %p55
        %p149 = pneg %p84
        %p150 = pneg %p81
        %p151 = scmp.lt.s32.totalorder %s16, 1
        %s152 = scalar_select %p151, %s16, 1
        %s153 = smul.addr %s152, 8
        %s154 = scalar_lea.vmem %s2, %s153
        %p155 = scmp.lt.s32.totalorder %s16, 1
        %s156 = scalar_select %p155, %s16, 1
        %s157 = smul.addr %s156, 8
        %s158 = scalar_lea.vmem %s2, %s157
        %v159 = vld [vmem:[%s1] sm:$0x1]
        %v160 = vld [vmem:[%s135] sm:$0xff]
        %v162 = vlaneseq
        %v163 = vshrl.u32 %v162, 7
        %v164 = vsub.s32 0, %v163
        %v165 = vrot.slane %v159, %v164
        %168 = vset.pattern.permute.xlu0 0
        %169 = vperm.xlu0 %168, %v160
        %v170 = vpop.permute.xlu0 %169
        %v172 = vadd.f32 %v165, %v170
        %v173 = verf.f32.pop %v172
        %v174 = vmul.f32 %v173, 0.5
        %v175 = vadd.f32 %v174, 0.5
        %176 = vset.pattern.permute.xlu0 1
        %177 = vperm.xlu0 %176, %v160
        %v178 = vpop.permute.xlu0 %177
        %v180 = vadd.f32 %v165, %v178
        %v181 = verf.f32.pop %v180
        %v182 = vmul.f32 %v181, 0.5
        %v183 = vadd.f32 %v182, 0.5
        %v184 = vmul.f32 %v175, %v183
        %185 = vset.pattern.permute.xlu0 2
        %186 = vperm.xlu0 %185, %v160
        %v187 = vpop.permute.xlu0 %186
        %v189 = vadd.f32 %v165, %v187
        %v190 = verf.f32.pop %v189
        %v191 = vmul.f32 %v190, 0.5
        %v192 = vadd.f32 %v191, 0.5
        %v193 = vmul.f32 %v184, %v192
        %194 = vset.pattern.permute.xlu0 3
        %195 = vperm.xlu0 %194, %v160
        %v196 = vpop.permute.xlu0 %195
        %v198 = vadd.f32 %v165, %v196
        %v199 = verf.f32.pop %v198
        %v200 = vmul.f32 %v199, 0.5
        %v201 = vadd.f32 %v200, 0.5
        %v202 = vmul.f32 %v193, %v201
        %203 = vset.pattern.permute.xlu0 4
        %204 = vperm.xlu0 %203, %v160
        %v205 = vpop.permute.xlu0 %204
        %v207 = vadd.f32 %v165, %v205
        %v208 = verf.f32.pop %v207
        %v209 = vmul.f32 %v208, 0.5
        %v210 = vadd.f32 %v209, 0.5
        %v211 = vmul.f32 %v202, %v210
        %212 = vset.pattern.permute.xlu0 5
        %213 = vperm.xlu0 %212, %v160
        %v214 = vpop.permute.xlu0 %213
        %v216 = vadd.f32 %v165, %v214
        %v217 = verf.f32.pop %v216
        %v218 = vmul.f32 %v217, 0.5
        %v219 = vadd.f32 %v218, 0.5
        %v220 = vmul.f32 %v211, %v219
        %221 = vset.pattern.permute.xlu0 6
        %222 = vperm.xlu0 %221, %v160
        %v223 = vpop.permute.xlu0 %222
        %v225 = vadd.f32 %v165, %v223
        %v226 = verf.f32.pop %v225
        %v227 = vmul.f32 %v226, 0.5
        %v228 = vadd.f32 %v227, 0.5
        %v229 = vmul.f32 %v220, %v228
        %230 = vset.pattern.permute.xlu0 7
        %231 = vperm.xlu0 %230, %v160
        %v232 = vpop.permute.xlu0 %231
        %v234 = vadd.f32 %v165, %v232
        %v235 = verf.f32.pop %v234
        %v236 = vmul.f32 %v235, 0.5
        %v237 = vadd.f32 %v236, 0.5
        %v238 = vmul.f32 %v229, %v237
        %239 = vset.pattern.permute.xlu0 8
        %240 = vperm.xlu0 %239, %v160
        %v241 = vpop.permute.xlu0 %240
        %v243 = vadd.f32 %v165, %v241
        %v244 = verf.f32.pop %v243
        %v245 = vmul.f32 %v244, 0.5
        %v246 = vadd.f32 %v245, 0.5
        %v247 = vmul.f32 %v238, %v246
        %248 = vadd.xlane.f32.xlu0 %v247
        %v249 = vpop.xlane.xlu0 %248
        %v250 = vmul.f32 %v249, -0.0078125
        %vm251 = vcmask 7168
        %252 = vst.msk [vmem:[%s158] sm:$0xff] %vm251, %v250
        %p253 = scmp.lt.s32.totalorder %s16, 1
        %s254 = scalar_select %p253, %s16, 1
        %s255 = smul.addr %s254, 8
        %s256 = scalar_lea.vmem %s2, %s255
        // Predicated region
        $region33: #{tpu_custom_call.1} parent=27 // pred_check
          %p257 = pneg %p81
        $region34: #{tpu_custom_call.1} parent=27 // pred_check_branch
          %259 = sbr.rel (%p257) target = $region36
        $region35: #{tpu_custom_call.1} parent=27 // pred_region
          _
        $region36: #{tpu_custom_call.1} parent=27 // pred_fallthru
          _
      $region28: #{tpu_custom_call.1} parent=5 // pred_fallthru
        _
      %p260 = scmp.le.s32.totalorder 2, %s11
      // Predicated region
      $region37: #{tpu_custom_call.1} parent=5 // pred_check
        %p261 = pneg %p260
      $region38: #{tpu_custom_call.1} parent=5 // pred_check_branch
        %263 = sbr.rel (%p261) target = $region40
      $region39: #{tpu_custom_call.1} parent=5 // pred_region
        %s264 = ssub.s32 %s11, 2
        // Predicated region
        $region41: #{tpu_custom_call.1} parent=39 // pred_check
          %p265 = pneg %p87
        $region42: #{tpu_custom_call.1} parent=39 // pred_check_branch
          %267 = sbr.rel (%p265) target = $region44
        $region43: #{tpu_custom_call.1} parent=39 // pred_region
          %p268 = scmp.lt.s32.totalorder %s17, 1
          %s269 = scalar_select %p268, %s17, 1
          %s270 = smul.addr %s269, 8
          %s271 = scalar_lea.vmem %s2, %s270
        $region44: #{tpu_custom_call.1} parent=39 // pred_fallthru
          _
      $region40: #{tpu_custom_call.1} parent=5 // pred_fallthru
        _
    $region6: #{tpu_custom_call.1} parent=1 // loop_footer
      %s15 = sadd.s32 1, %s11
    $region7: #{tpu_custom_call.1} parent=1 // loop_footer_branch
      %10 = sbr.rel target = $region3
    $region8: #{tpu_custom_call.1} parent=1 // loop_exit
      _
    %272 = vsyncpa [#allocation3], 1
    %s273 = scalar_lea.sflag [#allocation3], 1
    %274 = vsyncpa %s273, 1

</llo_original>
